<compile_context>
chip_gen: v5e
topology: v5e:2x2
jax: 0.10.0
libtpu: 0.0.40
codegen_flags: <defaults>
</compile_context>

<pallas_src>
import jax
import jax.numpy as jnp
from jax.experimental import pallas as pl
from jax.experimental.pallas import tpu as pltpu


def _linear_kernel(x_ref, w_ref, b_ref, o_ref):
    # x_ref: (tile_n, p) native dtype; w_ref: (1, p) f32 (resident);
    # b_ref: (1,) f32 in SMEM; o_ref: (1, tile_n) f32 (lane-dense).
    x = x_ref[...].astype(jnp.float32)          # stream native dtype, cast on VPU
    w = w_ref[...].astype(jnp.float32)          # (1, p) broadcasts over rows
    b = b_ref[0]                                # scalar read from SMEM
    y = jnp.sum(x * w, axis=-1) + b             # VPU mul + XLU lane reduce -> (tile_n,)
    o_ref[...] = y.reshape(1, -1).astype(o_ref.dtype)   # lane-dense row store


def _round_up(v, m):
    return ((v + m - 1) // m) * m


def _vmem_capacity_bytes():
    try:
        return int(pltpu.get_tpu_info().vmem_capacity_bytes)
    except Exception:
        return 64 * 1024 * 1024                 # conservative fallback (v7x per-TC)


def _choose_tiling(n, p, itemsize, vmem_cap):
    """Pick (tile_n, grid_n): tile sized purely by VMEM byte budget, multiple of
    128 (lane-dense output block), keep >= 2 (prefer even) grid steps when N allows."""
    p_pad = _round_up(max(p, 1), 128)           # lane padding of the feature axis
    row_bytes = p_pad * itemsize
    budget = min(vmem_cap // 3, 24 * 1024 * 1024)   # per x tile (x double-buffered)
    tile = max(8, budget // row_bytes)

    if tile >= n:
        if n >= 256:
            # Whole batch fits in one tile: split anyway so v7x's 2 TCs get work.
            tile = _round_up(pl.cdiv(n, 2), 128)
        else:
            return n, 1                         # tiny batch: one full-extent block
    else:
        tile = max(128, (tile // 128) * 128)
        grid = pl.cdiv(n, tile)
        if grid > 1 and grid % 2 == 1:          # prefer even step count (megacore)
            tile = max(128, _round_up(pl.cdiv(n, grid + 1), 128))

    return tile, pl.cdiv(n, tile)


@jax.jit
def linear_regression_forward(x, weight, bias):
    """Forward pass of nn.Linear(p, 1): returns x @ weight.T + bias, shape (N, 1)."""
    n, p = x.shape
    assert weight.shape == (1, p)

    itemsize = jnp.dtype(x.dtype).itemsize
    vmem_cap = _vmem_capacity_bytes()
    tile_n, grid_n = _choose_tiling(n, p, itemsize, vmem_cap)

    # Explicit scoped-VMEM limit sized to the actual double-buffered footprint.
    p_pad = _round_up(max(p, 1), 128)
    x_tile_bytes = tile_n * p_pad * itemsize
    out_tile_bytes = 8 * _round_up(tile_n, 128) * 4     # (1, tile_n) padded to 8 sublanes
    w_bytes = 8 * p_pad * 4
    vmem_needed = 2 * x_tile_bytes + 2 * out_tile_bytes + w_bytes + (2 << 20)
    vmem_limit = int(min(max(vmem_needed, 16 << 20), vmem_cap))

    w_f32 = weight.astype(jnp.float32)
    b_f32 = bias.reshape((1,)).astype(jnp.float32)

    # Advisory cost: account for lane padding of x read and sublane padding of the
    # (1, N) output writeback.
    cost = pl.CostEstimate(
        flops=2 * n * p,
        transcendentals=0,
        bytes_accessed=n * p_pad * itemsize + p_pad * 4 + 8 * n * 4,
    )

    out = pl.pallas_call(
        _linear_kernel,
        out_shape=jax.ShapeDtypeStruct((1, n), jnp.float32),
        grid=(grid_n,),
        in_specs=[
            pl.BlockSpec((tile_n, p), lambda i: (i, 0)),        # x: streamed batch tiles
            pl.BlockSpec((1, p), lambda i: (0, 0)),             # weight: VMEM resident
            pl.BlockSpec(memory_space=pltpu.MemorySpace.SMEM),  # bias: SMEM scalar
        ],
        out_specs=pl.BlockSpec((1, tile_n), lambda i: (0, i)),  # lane-dense output row
        compiler_params=pltpu.CompilerParams(
            dimension_semantics=("parallel",),
            vmem_limit_bytes=vmem_limit,
        ),
        cost_estimate=cost,
    )(x, w_f32, b_f32)

    return out.reshape(n, 1)


if __name__ == "__main__":
    key = jax.random.PRNGKey(0)
    kx, kw, kb, kx2 = jax.random.split(key, 4)

    # Small deterministic case: N = 8, p = 32 (single full-extent block).
    N, P = 8, 32
    x = jax.random.normal(kx, (N, P), dtype=jnp.float32)
    weight = jax.random.normal(kw, (1, P), dtype=jnp.float32) * 0.1
    bias = jax.random.normal(kb, (1,), dtype=jnp.float32)

    out = jax.block_until_ready(linear_regression_forward(x, weight, bias))
    ref = x @ weight.T + bias.reshape(1, 1)
    assert out.shape == (N, 1)
    assert jnp.allclose(out, ref, atol=1e-5, rtol=1e-5)

    # Ragged multi-step case: N = 1000 (exercises grid > 1 and masked last block).
    N2 = 1000
    x2 = jax.random.normal(kx2, (N2, P), dtype=jnp.float32)
    out2 = jax.block_until_ready(linear_regression_forward(x2, weight, bias))
    ref2 = x2 @ weight.T + bias.reshape(1, 1)
    assert out2.shape == (N2, 1)
    assert jnp.allclose(out2, ref2, atol=1e-5, rtol=1e-5)

    print("KERNEL_OK")
</pallas_src>

<mosaic_0001>
module attributes {stable_mosaic.version = 11 : i64} {
  func.func @_linear_kernel(%arg0: i32, %arg1: memref<8x32xf32, #tpu.memory_space<vmem>>, %arg2: memref<1x32xf32, #tpu.memory_space<vmem>>, %arg3: memref<1xf32, #tpu.memory_space<smem>>, %arg4: memref<1x8xf32, #tpu.memory_space<vmem>>) attributes {dimension_semantics = [#tpu.dimension_semantics<parallel>], iteration_bounds = array<i64: 1>, scalar_prefetch = 0 : i64, scratch_operands = 0 : i64, tpu.core_type = #tpu.core_type<tc>, window_params = [{transform_indices = @transform_0, window_bounds = array<i64: 8, 32>}, {pipeline_mode = #tpu.pipeline_mode<synchronous>, transform_indices = @transform_1, window_bounds = array<i64: 1, 32>}, {transform_indices = @transform_2, window_bounds = array<i64: 1>}, {transform_indices = @transform_3, window_bounds = array<i64: 1, 8>}]} {
    %c0 = arith.constant 0 : index
    %c0_0 = arith.constant 0 : index
    %0 = vector.load %arg1[%c0, %c0_0] : memref<8x32xf32, #tpu.memory_space<vmem>>, vector<8x32xf32>
    %c0_1 = arith.constant 0 : index
    %c0_2 = arith.constant 0 : index
    %1 = vector.load %arg2[%c0_1, %c0_2] : memref<1x32xf32, #tpu.memory_space<vmem>>, vector<1x32xf32>
    %c0_3 = arith.constant 0 : index
    %2 = memref.load %arg3[%c0_3] : memref<1xf32, #tpu.memory_space<smem>>
    %3 = vector.broadcast %1 : vector<1x32xf32> to vector<8x32xf32>
    %4 = arith.mulf %0, %3 : vector<8x32xf32>
    %cst = arith.constant dense<0.000000e+00> : vector<8xf32>
    %5 = vector.multi_reduction <add>, %4, %cst [1] : vector<8x32xf32> to vector<8xf32>
    %6 = vector.broadcast %2 : f32 to vector<8xf32>
    %7 = arith.addf %5, %6 : vector<8xf32>
    %8 = vector.shape_cast %7 : vector<8xf32> to vector<1x8xf32>
    %c0_4 = arith.constant 0 : index
    %c0_5 = arith.constant 0 : index
    %9 = vector.load %arg4[%c0_4, %c0_5] : memref<1x8xf32, #tpu.memory_space<vmem>>, vector<1x8xf32>
    tpu.vector_store %arg4[%c0_4, %c0_5], %8 {strides = array<i32>} : memref<1x8xf32, #tpu.memory_space<vmem>>, vector<1x8xf32>,
    return
  }
  func.func @transform_0(%arg0: i32) -> (i32, i32) {
    %c0_i32 = arith.constant 0 : i32
    %c0_i32_0 = arith.constant 0 : i32
    return %arg0, %c0_i32 : i32, i32
  }
  func.func @transform_1(%arg0: i32) -> (i32, i32) {
    %c0_i32 = arith.constant 0 : i32
    %c0_i32_0 = arith.constant 0 : i32
    %c0_i32_1 = arith.constant 0 : i32
    return %c0_i32, %c0_i32_0 : i32, i32
  }
  func.func @transform_2(%arg0: i32) -> i32 {
    %c0_i32 = arith.constant 0 : i32
    %c0_i32_0 = arith.constant 0 : i32
    return %c0_i32 : i32
  }
  func.func @transform_3(%arg0: i32) -> (i32, i32) {
    %c0_i32 = arith.constant 0 : i32
    %c0_i32_0 = arith.constant 0 : i32
    return %c0_i32, %arg0 : i32, i32
  }
}

</mosaic_0001>

<llo_original>
// kernel: linear_regression_forward.1
$region0: #{linear_regression_forward.1}
  #allocation0 [shape = 'u32[]', space=smem, size = 0x4, offset = 0x4, fixed_abs, tag = 'smem constant byte address 0x4 - core index']
  #allocation1 [shape = 'u32[72,128]{1,0:T(1,128)}', space=vmem, size = 0x9000, scoped, tag = 'internal scratch']
  #allocation2 [shape = 'f32[1]{0:T(128)S(6)}', space=smem, size = 0x200, scoped, tag = 'scoped memory for linear_regression_forward.1']
  %s0 = inlined_call_operand.hbm [shape: f32[8,32], index: 0, kind: input, shape index: {}]
  %s1 = inlined_call_operand.vmem [shape: f32[1,32], index: 1, kind: input, shape index: {}]
  %s2 = inlined_call_operand.<no memory space> [shape: f32[1], index: 2, kind: input, shape index: {}]
  %s3 = inlined_call_operand.hbm [shape: f32[1,8], index: 3, kind: output, shape index: {}]
  %s4 = sld [smem:[#allocation0]]
  $region26: #{linear_regression_forward.1} parent=0
    _
  %s6 = ssub.s32 1, %s4
  %s7 = scalar_select 0, %s6, %s4
  %8 = sst [smem:[#allocation2]] %s2
  $region1: #{linear_regression_forward.1} parent=0
    #allocation3 [shape = 'u8[4096]{0}', space=vmem, size = 0x1000, scoped, tag = 'input window, operand 0, single buffered']
    #allocation4 [shape = 's32[1]{0}', space=sflag, size = 0x4, scoped, tag = 'scoped memory for linear_regression_forward.1']
    #allocation5 [shape = 's32[1]{0}', space=sflag, size = 0x4, scoped, tag = 'scoped memory for linear_regression_forward.1']
    #allocation6 [shape = 'u8[512]{0}', space=vmem, size = 0x400, scoped, tag = 'output window, operand 0, single buffered']
    %9 = vsyncpa [#allocation4], 0
    %10 = vsyncpa [#allocation5], 0
    // Predicated region
    $region2: #{linear_regression_forward.1} parent=1 // pred_check
      _
    $region3: #{linear_regression_forward.1} parent=1 // pred_check_branch
      %12 = sbr.rel (0) target = $region5
    $region4: #{linear_regression_forward.1} parent=1 // pred_region
      %14 = vsyncadd [#allocation4], 0
      %s16 = sshll.u32 %s0, 4
      %s17 = int_to_ptr.hbm [resolvable:$true] %s16
      %s18 = sshll.u32 [#allocation3], 4
      %s19 = int_to_ptr.vmem [resolvable:$true] %s18
      %21 = dma.hbm_to_vmem [thread:$0]  %s17, 128, %s19, [#allocation4]
    $region5: #{linear_regression_forward.1} parent=1 // pred_fallthru
      _
    // Predicated region
    $region6: #{linear_regression_forward.1} parent=1 // pred_check
      _
    $region7: #{linear_regression_forward.1} parent=1 // pred_check_branch
      %23 = sbr.rel (0) target = $region9
    $region8: #{linear_regression_forward.1} parent=1 // pred_region
      _
    $region9: #{linear_regression_forward.1} parent=1 // pred_fallthru
      _
    // Predicated region
    $region10: #{linear_regression_forward.1} parent=1 // pred_check
      _
    $region11: #{linear_regression_forward.1} parent=1 // pred_check_branch
      %25 = sbr.rel (0) target = $region13
    $region12: #{linear_regression_forward.1} parent=1 // pred_region
      _
    $region13: #{linear_regression_forward.1} parent=1 // pred_fallthru
      _
    // Predicated region
    $region14: #{linear_regression_forward.1} parent=1 // pred_check
      _
    $region15: #{linear_regression_forward.1} parent=1 // pred_check_branch
      %27 = sbr.rel (0) target = $region17
    $region16: #{linear_regression_forward.1} parent=1 // pred_region
      %29 = dma.done [#allocation4], 128
    $region17: #{linear_regression_forward.1} parent=1 // pred_fallthru
      _
    %v30 = vld [vmem:[#allocation3] sm:$0xff]
    %v31 = vld [vmem:[%s1] sm:$0x1]
    %s32 = sld [smem:[#allocation2]]
    %v34 = vperm.slane %v31, 0
    %v36 = vmul.f32 %v30, %v34
    %vm37 = vcmask 261120
    %v38 = vsel %vm37, %v36, 0.0
    %39 = vadd.xlane.f32.xlu0 %v38
    %v40 = vpop.xlane.xlu0 %39
    %v41 = vstv %s32
    %v42 = vadd.f32 %v40, %v41
    %v44 = vlaneseq
    %v45 = vand.u32 %v44, 127
    %v46 = vperm.slane %v42, %v45
    %vm48 = vcmask 57344
    %49 = vst.msk [vmem:[#allocation6] sm:$0x1] %vm48, %v46
    // Predicated region
    $region18: #{linear_regression_forward.1} parent=1 // pred_check
      _
    $region19: #{linear_regression_forward.1} parent=1 // pred_check_branch
      %51 = sbr.rel (0) target = $region21
    $region20: #{linear_regression_forward.1} parent=1 // pred_region
      %53 = vsyncadd [#allocation5], 0
      %s55 = sshll.u32 [#allocation6], 4
      %s56 = int_to_ptr.vmem [resolvable:$true] %s55
      %s57 = sshll.u32 %s3, 4
      %s58 = int_to_ptr.hbm [resolvable:$true] %s57
      %60 = dma.vmem_to_hbm [thread:$0]  %s56, 16, %s58, [#allocation5]
    $region21: #{linear_regression_forward.1} parent=1 // pred_fallthru
      _
    // Predicated region
    $region22: #{linear_regression_forward.1} parent=1 // pred_check
      _
    $region23: #{linear_regression_forward.1} parent=1 // pred_check_branch
      %62 = sbr.rel (0) target = $region25
    $region24: #{linear_regression_forward.1} parent=1 // pred_region
      %64 = dma.done [#allocation5], 16
    $region25: #{linear_regression_forward.1} parent=1 // pred_fallthru
      _
    %65 = vsyncpa [#allocation4], 1
    %66 = vsyncpa [#allocation5], 1

</llo_original>
